<compile_context>
chip_gen: v7x
topology: tpu7x:2x2x1
jax: 0.10.0
libtpu: 0.0.40
codegen_flags: <defaults>
</compile_context>

<pallas_src>
import functools

import jax
import jax.numpy as jnp
from jax.experimental import pallas as pl
from jax.experimental.pallas import tpu as pltpu


def _round_up(v, m):
    return ((v + m - 1) // m) * m


@functools.lru_cache(maxsize=None)
def _vmem_budget_bytes():
    """~80% of the physical per-core VMEM (≈102 MiB v5e/v6e, ≈51 MiB/TC v7x).
    Falls back to a v7x-safe 64 MiB if the query is unavailable."""
    cap = 64 << 20
    try:
        info = pltpu.get_tpu_info()
        cap = int(getattr(info, "vmem_capacity_bytes", cap)) or cap
    except Exception:
        pass
    return int(cap * 0.8)


def _pick_col_tile(dp, want):
    """Largest multiple of 128 <= want that divides dp (dp is a 128-multiple)."""
    t = max(128, min(dp, _round_up(want, 128)))
    t = (t // 128) * 128
    while dp % t != 0:
        t -= 128
    return t


# ---------------------------------------------------------------------------
# Kernels
# ---------------------------------------------------------------------------
def _residual_kernel_resident(x_ref, w_ref, b_ref, o_ref):
    """o = x @ W + b + x with the whole W / b resident in VMEM."""
    x = x_ref[...]                                              # (TM, Dp)
    y = jnp.dot(x.astype(w_ref.dtype), w_ref[...],
                preferred_element_type=jnp.float32)             # MXU, f32 acc
    y = y + b_ref[...].astype(jnp.float32)                      # (1, Dp) broadcast
    o_ref[...] = (y + x.astype(jnp.float32)).astype(o_ref.dtype)  # f32 epilogue


def _residual_kernel_split(xk_ref, w_ref, b_ref, xn_ref, o_ref, acc_ref):
    """Large-D fallback: grid (rows, out-cols, K); f32 accumulator across K."""
    k = pl.program_id(2)

    @pl.when(k == 0)
    def _():
        acc_ref[...] = jnp.zeros_like(acc_ref)

    acc_ref[...] += jnp.dot(xk_ref[...].astype(w_ref.dtype), w_ref[...],
                            preferred_element_type=jnp.float32)

    @pl.when(k == pl.num_programs(2) - 1)
    def _():
        y = acc_ref[...] + b_ref[...].astype(jnp.float32)
        o_ref[...] = (y + xn_ref[...].astype(jnp.float32)).astype(o_ref.dtype)


# ---------------------------------------------------------------------------
# Wrapper
# ---------------------------------------------------------------------------
@functools.partial(jax.jit, static_argnames=("tm", "tn", "tk"))
def residual_linear(x, w, b, *, tm=1024, tn=None, tk=None):
    """Pallas implementation of Residual(Linear(D, D)) applied to x (B, N, D)."""
    B, N, D = x.shape
    R = B * N
    xb = jnp.dtype(x.dtype).itemsize
    wb = jnp.dtype(w.dtype).itemsize
    pack = max(8, 32 // max(xb, 1))            # sublane pack: 8 f32 / 16 bf16 / 32 i8

    x2 = x.reshape(R, D)                       # contiguous reshape: free

    # Lane dim: pad to a 128-multiple ONLY when D is not already lane-aligned.
    lane_pad = (D % 128) != 0
    Dp = _round_up(max(D, 128), 128)
    if lane_pad:
        x2 = jnp.pad(x2, ((0, 0), (0, Dp - D)))             # zeros -> exact math
        w2 = jnp.pad(w, ((0, Dp - D), (0, Dp - D)))
        b2 = jnp.pad(b, (0, Dp - D)).reshape(1, Dp)
    else:
        w2, b2 = w, b.reshape(1, Dp)

    # Row tile: never pad rows; ragged last block is masked by Pallas.
    TM = max(pack, min(_round_up(tm, pack), _round_up(R, pack)))
    # Megacore (v7x): make sure the "parallel" row grid has >= 2 steps if possible.
    if R > pack and pl.cdiv(R, TM) < 2:
        TM = max(pack, _round_up(pl.cdiv(R, 2), pack))

    budget = _vmem_budget_bytes()

    def resident_bytes(tm_):
        # The pipeline allocator double-buffers EVERY block, including the
        # grid-invariant W / b (their re-fetch DMA is skipped, but both
        # buffers are reserved) -> count them twice.
        return 2 * (Dp * Dp + Dp) * wb + 2 * 2 * tm_ * Dp * xb

    use_split = (tn is not None) or (tk is not None)
    if not use_split:
        while TM > pack and resident_bytes(TM) > budget:
            TM = max(pack, _round_up(TM // 2, pack))
        use_split = resident_bytes(TM) > budget

    if not use_split:
        # ------------------------- resident-W path -------------------------
        vmem_limit = int(min(max(2 * resident_bytes(TM), 32 << 20), budget))
        out = pl.pallas_call(
            _residual_kernel_resident,
            out_shape=jax.ShapeDtypeStruct((R, Dp), x.dtype),
            grid=(pl.cdiv(R, TM),),
            in_specs=[
                pl.BlockSpec((TM, Dp), lambda i: (i, 0)),   # x row tile (pipelined)
                pl.BlockSpec((Dp, Dp), lambda i: (0, 0)),   # W  (VMEM resident)
                pl.BlockSpec((1, Dp), lambda i: (0, 0)),    # b  (VMEM resident)
            ],
            out_specs=pl.BlockSpec((TM, Dp), lambda i: (i, 0)),
            compiler_params=pltpu.CompilerParams(
                dimension_semantics=("parallel",),          # megacore on v7x
                vmem_limit_bytes=vmem_limit,
            ),
            cost_estimate=pl.CostEstimate(
                flops=2 * R * Dp * Dp,
                transcendentals=0,
                bytes_accessed=2 * R * Dp * xb + (Dp * Dp + Dp) * wb,
            ),
        )(x2, w2, b2)
    else:
        # ----------------------- K/N-split fallback -------------------------
        TN = _pick_col_tile(Dp, tn if tn is not None else 512)
        TK = _pick_col_tile(Dp, tk if tk is not None else 512)

        def split_bytes(tm_, tn_, tk_):
            return (2 * (tm_ * tk_ + tm_ * tn_ + tm_ * tn_) * xb  # x_k, x_res, out
                    + 2 * (tk_ * tn_ + tn_) * wb                   # W, b tiles
                    + tm_ * tn_ * 4)                               # f32 accumulator

        while split_bytes(TM, TN, TK) > budget and TM > pack:
            TM = max(pack, _round_up(TM // 2, pack))
        while split_bytes(TM, TN, TK) > budget and max(TN, TK) > 128:
            if TN >= TK and TN > 128:
                TN = _pick_col_tile(Dp, TN // 2)
            else:
                TK = _pick_col_tile(Dp, TK // 2)

        vmem_limit = int(min(max(2 * split_bytes(TM, TN, TK), 32 << 20), budget))
        out = pl.pallas_call(
            _residual_kernel_split,
            out_shape=jax.ShapeDtypeStruct((R, Dp), x.dtype),
            grid=(pl.cdiv(R, TM), Dp // TN, Dp // TK),
            in_specs=[
                pl.BlockSpec((TM, TK), lambda i, j, k: (i, k)),   # x, matmul operand
                pl.BlockSpec((TK, TN), lambda i, j, k: (k, j)),   # W tile
                pl.BlockSpec((1, TN), lambda i, j, k: (0, j)),    # b tile
                pl.BlockSpec((TM, TN), lambda i, j, k: (i, j)),   # x, residual add
            ],
            out_specs=pl.BlockSpec((TM, TN), lambda i, j, k: (i, j)),
            scratch_shapes=[pltpu.VMEM((TM, TN), jnp.float32)],
            compiler_params=pltpu.CompilerParams(
                dimension_semantics=("parallel", "parallel", "arbitrary"),
                vmem_limit_bytes=vmem_limit,
            ),
            cost_estimate=pl.CostEstimate(
                flops=2 * R * Dp * Dp,
                transcendentals=0,
                bytes_accessed=(Dp // TN + 2) * R * Dp * xb + (Dp * Dp + Dp) * wb,
            ),
        )(x2, w2, b2, x2)

    if lane_pad:
        out = out[:, :D]
    return out.reshape(B, N, D)


class Residual:
    """Mirror of the torch module: holds `fn` (here a linear branch W, b) and
    computes fn(x) + x via the fused Pallas kernel.
    # TODO(synk): a generic torch `fn` sub-module cannot be translated
    # generically; this implementation fixes fn(x) = x @ W + b."""

    def __init__(self, w, b, compute_dtype=None):
        # Optional one-time weight downcast (e.g. bf16 on v6e/v7x): halves
        # resident-W VMEM and uses the native bf16 MXU; accumulation stays f32.
        self.w = w.astype(compute_dtype) if compute_dtype is not None else w
        self.b = b

    def __call__(self, x, **kw):
        return residual_linear(x, self.w, self.b, **kw)


if __name__ == "__main__":
    key = jax.random.PRNGKey(0)
    kx, kw, kb, kx2, kw2, kb2 = jax.random.split(key, 6)
    HI = jax.lax.Precision.HIGHEST

    # ---- check 1: small, non-lane-aligned D (padded path) + ragged rows ----
    B, N, D = 2, 7, 32
    x = jax.random.normal(kx, (B, N, D), dtype=jnp.float32)
    w = jax.random.normal(kw, (D, D), dtype=jnp.float32) * 0.05
    b = jax.random.normal(kb, (D,), dtype=jnp.float32) * 0.05
    out = jax.block_until_ready(Residual(w, b)(x))
    ref = jnp.einsum("bnd,de->bne", x, w, precision=HI) + b + x
    assert out.shape == x.shape
    assert jnp.allclose(out, ref, atol=5e-3, rtol=5e-3), "mismatch (padded path)"

    # ---- check 2: lane-aligned D (no pad / no slice), resident-W path -------
    B2, N2, D2 = 2, 8, 256
    x2 = jax.random.normal(kx2, (B2, N2, D2), dtype=jnp.float32)
    w2 = jax.random.normal(kw2, (D2, D2), dtype=jnp.float32) * 0.02
    b2 = jax.random.normal(kb2, (D2,), dtype=jnp.float32) * 0.02
    ref2 = jnp.einsum("bnd,de->bne", x2, w2, precision=HI) + b2 + x2
    out2 = jax.block_until_ready(Residual(w2, b2)(x2))
    assert jnp.allclose(out2, ref2, atol=5e-3, rtol=5e-3), "mismatch (resident path)"

    # ---- check 3: forced K/N-split path (large-D fallback machinery) --------
    out3 = jax.block_until_ready(residual_linear(x2, w2, b2, tm=8, tn=128, tk=128))
    assert jnp.allclose(out3, ref2, atol=5e-3, rtol=5e-3), "mismatch (split path)"

    # ---- check 4: bf16 weight storage (v6e/v7x fast path), f32 accumulate ---
    out4 = jax.block_until_ready(Residual(w2, b2, compute_dtype=jnp.bfloat16)(x2))
    assert jnp.allclose(out4, ref2, atol=5e-2, rtol=5e-2), "mismatch (bf16 W path)"

    print("KERNEL_OK")
</pallas_src>

<mosaic_0001>
module attributes {stable_mosaic.version = 11 : i64} {
  func.func @_residual_kernel_resident(%arg0: i32, %arg1: memref<8x128xf32, #tpu.memory_space<vmem>>, %arg2: memref<128x128xf32, #tpu.memory_space<vmem>>, %arg3: memref<1x128xf32, #tpu.memory_space<vmem>>, %arg4: memref<8x128xf32, #tpu.memory_space<vmem>>) attributes {dimension_semantics = [#tpu.dimension_semantics<parallel>], iteration_bounds = array<i64: 2>, scalar_prefetch = 0 : i64, scratch_operands = 0 : i64, tpu.core_type = #tpu.core_type<tc>, window_params = [{transform_indices = @transform_0, window_bounds = array<i64: 8, 128>}, {pipeline_mode = #tpu.pipeline_mode<synchronous>, transform_indices = @transform_1, window_bounds = array<i64: 128, 128>}, {pipeline_mode = #tpu.pipeline_mode<synchronous>, transform_indices = @transform_2, window_bounds = array<i64: 1, 128>}, {transform_indices = @transform_3, window_bounds = array<i64: 8, 128>}]} {
    %c0 = arith.constant 0 : index
    %c0_0 = arith.constant 0 : index
    %0 = vector.load %arg1[%c0, %c0_0] : memref<8x128xf32, #tpu.memory_space<vmem>>, vector<8x128xf32>
    %c0_1 = arith.constant 0 : index
    %c0_2 = arith.constant 0 : index
    %1 = vector.load %arg2[%c0_1, %c0_2] : memref<128x128xf32, #tpu.memory_space<vmem>>, vector<128x128xf32>
    %cst = arith.constant dense<0.000000e+00> : vector<8x128xf32>
    %2 = tpu.matmul %0, %1, %cst {dimension_numbers = #tpu.dot_dimension_numbers<[1], [0], [0], [1], [0, 0, 1, 1], [], []>} : vector<8x128xf32>, vector<128x128xf32>, vector<8x128xf32> -> vector<8x128xf32>
    %c0_3 = arith.constant 0 : index
    %c0_4 = arith.constant 0 : index
    %3 = vector.load %arg3[%c0_3, %c0_4] : memref<1x128xf32, #tpu.memory_space<vmem>>, vector<1x128xf32>
    %4 = vector.broadcast %3 : vector<1x128xf32> to vector<8x128xf32>
    %5 = arith.addf %2, %4 : vector<8x128xf32>
    %6 = arith.addf %5, %0 : vector<8x128xf32>
    %c0_5 = arith.constant 0 : index
    %c0_6 = arith.constant 0 : index
    %7 = vector.load %arg4[%c0_5, %c0_6] : memref<8x128xf32, #tpu.memory_space<vmem>>, vector<8x128xf32>
    tpu.vector_store %arg4[%c0_5, %c0_6], %6 {strides = array<i32>} : memref<8x128xf32, #tpu.memory_space<vmem>>, vector<8x128xf32>,
    return
  }
  func.func @transform_0(%arg0: i32) -> (i32, i32) {
    %c0_i32 = arith.constant 0 : i32
    %c0_i32_0 = arith.constant 0 : i32
    return %arg0, %c0_i32 : i32, i32
  }
  func.func @transform_1(%arg0: i32) -> (i32, i32) {
    %c0_i32 = arith.constant 0 : i32
    %c0_i32_0 = arith.constant 0 : i32
    %c0_i32_1 = arith.constant 0 : i32
    return %c0_i32, %c0_i32_0 : i32, i32
  }
  func.func @transform_2(%arg0: i32) -> (i32, i32) {
    %c0_i32 = arith.constant 0 : i32
    %c0_i32_0 = arith.constant 0 : i32
    %c0_i32_1 = arith.constant 0 : i32
    return %c0_i32, %c0_i32_0 : i32, i32
  }
  func.func @transform_3(%arg0: i32) -> (i32, i32) {
    %c0_i32 = arith.constant 0 : i32
    %c0_i32_0 = arith.constant 0 : i32
    return %arg0, %c0_i32 : i32, i32
  }
}

</mosaic_0001>

<llo_original>
// kernel: residual_linear.1
$region0: #{residual_linear.1}
  #allocation0 [shape = 'u32[]', space=smem, size = 0x4, offset = 0x4, fixed_abs, tag = 'smem constant byte address 0x4 - core index']
  #allocation1 [shape = 'u32[144,128]{1,0:T(1,128)}', space=vmem, size = 0x12000, scoped, tag = 'internal scratch']
  %s0 = inlined_call_operand.vmem [shape: f32[14,128], index: 0, kind: input, shape index: {}]
  %s1 = inlined_call_operand.vmem [shape: f32[128,128], index: 1, kind: input, shape index: {}]
  %s2 = inlined_call_operand.vmem [shape: f32[1,128], index: 2, kind: input, shape index: {}]
  %s3 = inlined_call_operand.vmem [shape: f32[14,128], index: 3, kind: output, shape index: {}]
  %s4 = sld [smem:[#allocation0]]
  $region45: #{residual_linear.1} parent=0
    _
  %s6 = ssub.s32 1, %s4
  %s7 = scalar_select 0, %s6, %s4
  loop: start=0, step=1, limit=4
  $region2: #{residual_linear.1} parent=0 // loop_pre_header
    _
  $region3: #{residual_linear.1} parent=0 // loop_header
    %s9 = sphi 0, %s13
    %p10 = scmp.ge.s32.totalorder %s9, 4
    %s19 = sphi 0, %s21
    %s22 = sphi 0, %s19
    %s23 = sphi 0, %s22
    %s39 = sphi 0, %s23
    %s43 = sphi 0, %s43
    %s45 = sphi 0, %s43
    %s46 = sphi 0, %s45
    %s60 = sphi 0, %s46
    %s64 = sphi 0, %s64
    %s66 = sphi 0, %s64
    %s67 = sphi 0, %s66
    %s81 = sphi 0, %s67
    %s87 = sphi 0, %s89
    %s90 = sphi 0, %s87
    %s91 = sphi 0, %s90
    %s107 = sphi 0, %s91
  $region4: #{residual_linear.1} parent=0 // loop_header_branch
    %12 = sbr.rel (%p10) target = $region8
  $region5: #{residual_linear.1} parent=0 // loop_body
    %s14 = ssub.s32 %s9, 1
    %s15 = ssub.s32 %s9, 2
    %s16 = sadd.s32 %s9, 1
    %s17 = ssub.s32 %s9, %s16
    %p18 = scmp.eq.s32.totalorder %s17, 0
    %s20 = sadd.s32 %s19, 1
    %s21 = scalar_select %p18, %s19, %s20
    %p24 = pneg %p18
    %p25 = scmp.eq.s32.totalorder %s9, 1
    %p26 = por %p24, %p25
    %p27 = scmp.ne.s32.totalorder %s19, %s22
    %p28 = scmp.eq.s32.totalorder %s9, 0
    %p29 = por %p27, %p28
    %p30 = scmp.ne.s32.totalorder %s19, %s22
    %p31 = scmp.eq.s32.totalorder %s14, 1
    %p32 = por %p30, %p31
    %p33 = scmp.ne.s32.totalorder %s22, %s23
    %p34 = scmp.eq.s32.totalorder %s14, 0
    %p35 = por %p33, %p34
    %p36 = scmp.ne.s32.totalorder %s22, %s23
    %p37 = scmp.eq.s32.totalorder %s15, 1
    %p38 = por %p36, %p37
    %p40 = scmp.ne.s32.totalorder %s23, %s39
    %p41 = scmp.eq.s32.totalorder %s15, 0
    %p42 = por %p40, %p41
    %s44 = sadd.s32 %s43, 1
    %p47 = scmp.eq.s32.totalorder %s9, 1
    %p48 = scmp.ne.s32.totalorder %s43, %s45
    %p49 = scmp.eq.s32.totalorder %s9, 0
    %p50 = por %p48, %p49
    %p51 = scmp.ne.s32.totalorder %s43, %s45
    %p52 = scmp.eq.s32.totalorder %s14, 1
    %p53 = por %p51, %p52
    %p54 = scmp.ne.s32.totalorder %s45, %s46
    %p55 = scmp.eq.s32.totalorder %s14, 0
    %p56 = por %p54, %p55
    %p57 = scmp.ne.s32.totalorder %s45, %s46
    %p58 = scmp.eq.s32.totalorder %s15, 1
    %p59 = por %p57, %p58
    %p61 = scmp.ne.s32.totalorder %s46, %s60
    %p62 = scmp.eq.s32.totalorder %s15, 0
    %p63 = por %p61, %p62
    %s65 = sadd.s32 %s64, 1
    %p68 = scmp.eq.s32.totalorder %s9, 1
    %p69 = scmp.ne.s32.totalorder %s64, %s66
    %p70 = scmp.eq.s32.totalorder %s9, 0
    %p71 = por %p69, %p70
    %p72 = scmp.ne.s32.totalorder %s64, %s66
    %p73 = scmp.eq.s32.totalorder %s14, 1
    %p74 = por %p72, %p73
    %p75 = scmp.ne.s32.totalorder %s66, %s67
    %p76 = scmp.eq.s32.totalorder %s14, 0
    %p77 = por %p75, %p76
    %p78 = scmp.ne.s32.totalorder %s66, %s67
    %p79 = scmp.eq.s32.totalorder %s15, 1
    %p80 = por %p78, %p79
    %p82 = scmp.ne.s32.totalorder %s67, %s81
    %p83 = scmp.eq.s32.totalorder %s15, 0
    %p84 = por %p82, %p83
    %s85 = ssub.s32 %s9, %s16
    %p86 = scmp.eq.s32.totalorder %s85, 0
    %s88 = sadd.s32 %s87, 1
    %s89 = scalar_select %p86, %s87, %s88
    %p92 = pneg %p86
    %p93 = scmp.eq.s32.totalorder %s9, 1
    %p94 = por %p92, %p93
    %p95 = scmp.ne.s32.totalorder %s87, %s90
    %p96 = scmp.eq.s32.totalorder %s9, 0
    %p97 = por %p95, %p96
    %p98 = scmp.ne.s32.totalorder %s87, %s90
    %p99 = scmp.eq.s32.totalorder %s14, 1
    %p100 = por %p98, %p99
    %p101 = scmp.ne.s32.totalorder %s90, %s91
    %p102 = scmp.eq.s32.totalorder %s14, 0
    %p103 = por %p101, %p102
    %p104 = scmp.ne.s32.totalorder %s90, %s91
    %p105 = scmp.eq.s32.totalorder %s15, 1
    %p106 = por %p104, %p105
    %p108 = scmp.ne.s32.totalorder %s91, %s107
    %p109 = scmp.eq.s32.totalorder %s15, 0
    %p110 = por %p108, %p109
    %p111 = scmp.le.s32.totalorder 1, %s9
    %p112 = scmp.lt.s32.totalorder %s9, 3
    %p113 = pnand %p111, %p112
    %p114 = pneg %p113
    // Predicated region
    $region9: #{residual_linear.1} parent=5 // pred_check
      _
    $region10: #{residual_linear.1} parent=5 // pred_check_branch
      %116 = sbr.rel (%p113) target = $region12
    $region11: #{residual_linear.1} parent=5 // pred_region
      %s117 = ssub.s32 %s9, 1
      // Predicated region
      $region13: #{residual_linear.1} parent=11 // pred_check
        %p118 = pneg %p56
      $region14: #{residual_linear.1} parent=11 // pred_check_branch
        %120 = sbr.rel (%p118) target = $region16
      $region15: #{residual_linear.1} parent=11 // pred_region
        _
      $region16: #{residual_linear.1} parent=11 // pred_fallthru
        _
      // Predicated region
      $region17: #{residual_linear.1} parent=11 // pred_check
        %p121 = pneg %p77
      $region18: #{residual_linear.1} parent=11 // pred_check_branch
        %123 = sbr.rel (%p121) target = $region20
      $region19: #{residual_linear.1} parent=11 // pred_region
        _
      $region20: #{residual_linear.1} parent=11 // pred_fallthru
        _
    $region12: #{residual_linear.1} parent=5 // pred_fallthru
      _
    %p124 = scmp.lt.s32.totalorder %s9, 2
    // Predicated region
    $region21: #{residual_linear.1} parent=5 // pred_check
      %p125 = pneg %p124
    $region22: #{residual_linear.1} parent=5 // pred_check_branch
      %127 = sbr.rel (%p125) target = $region24
    $region23: #{residual_linear.1} parent=5 // pred_region
      // Predicated region
      $region25: #{residual_linear.1} parent=23 // pred_check
        %p128 = pneg %p29
      $region26: #{residual_linear.1} parent=23 // pred_check_branch
        %130 = sbr.rel (%p128) target = $region28
      $region27: #{residual_linear.1} parent=23 // pred_region
        %p131 = scmp.lt.s32.totalorder %s9, 1
        %s132 = scalar_select %p131, %s9, 1
        %s133 = smul.addr %s132, 8
        %s134 = scalar_lea.vmem %s0, %s133
      $region28: #{residual_linear.1} parent=23 // pred_fallthru
        _
    $region24: #{residual_linear.1} parent=5 // pred_fallthru
      _
    %p135 = scmp.le.s32.totalorder 1, %s9
    %p136 = scmp.lt.s32.totalorder %s9, 3
    %p137 = pnand %p135, %p136
    %p138 = pneg %p137
    // Predicated region
    $region29: #{residual_linear.1} parent=5 // pred_check
      _
    $region30: #{residual_linear.1} parent=5 // pred_check_branch
      %140 = sbr.rel (%p137) target = $region32
    $region31: #{residual_linear.1} parent=5 // pred_region
      %s141 = ssub.s32 %s9, 1
      %p142 = scmp.lt.s32.totalorder %s14, 1
      %s143 = scalar_select %p142, %s14, 1
      %s144 = smul.addr %s143, 8
      %s145 = scalar_lea.vmem %s0, %s144
      %p146 = pneg %p35
      %p147 = pneg %p32
      %p148 = pneg %p56
      %p149 = pneg %p53
      %p150 = pneg %p77
      %p151 = pneg %p74
      %p152 = pneg %p103
      %p153 = pneg %p100
      %p154 = scmp.lt.s32.totalorder %s14, 1
      %s155 = scalar_select %p154, %s14, 1
      %s156 = smul.addr %s155, 8
      %s157 = scalar_lea.vmem %s3, %s156
      %p158 = scmp.lt.s32.totalorder %s14, 1
      %s159 = scalar_select %p158, %s14, 1
      %s160 = smul.addr %s159, 8
      %s161 = scalar_lea.vmem %s0, %s160
      %p162 = scmp.lt.s32.totalorder %s14, 1
      %s163 = scalar_select %p162, %s14, 1
      %s164 = smul.addr %s163, 8
      %s165 = scalar_lea.vmem %s3, %s164
      %v166 = vld [vmem:[%s161] sm:$0xff]
      %v167 = vld [vmem:[%s1] sm:$0xff]
      %v168 = vld [vmem:[%s1 + $0x8] sm:$0xff]
      %v169 = vld [vmem:[%s1 + $0x10] sm:$0xff]
      %v170 = vld [vmem:[%s1 + $0x18] sm:$0xff]
      %v171 = vld [vmem:[%s1 + $0x20] sm:$0xff]
      %v172 = vld [vmem:[%s1 + $0x28] sm:$0xff]
      %v173 = vld [vmem:[%s1 + $0x30] sm:$0xff]
      %v174 = vld [vmem:[%s1 + $0x38] sm:$0xff]
      %v175 = vld [vmem:[%s1 + $0x40] sm:$0xff]
      %v176 = vld [vmem:[%s1 + $0x48] sm:$0xff]
      %v177 = vld [vmem:[%s1 + $0x50] sm:$0xff]
      %v178 = vld [vmem:[%s1 + $0x58] sm:$0xff]
      %v179 = vld [vmem:[%s1 + $0x60] sm:$0xff]
      %v180 = vld [vmem:[%s1 + $0x68] sm:$0xff]
      %v181 = vld [vmem:[%s1 + $0x70] sm:$0xff]
      %v182 = vld [vmem:[%s1 + $0x78] sm:$0xff]
      %v183 = vld [vmem:[%s2] sm:$0x1]
      %v185 = vlaneseq
      %v186 = vshrl.u32 %v185, 7
      %v187 = vsub.s32 0, %v186
      %v188 = vrot.slane %v183, %v187
      %190 = vmatprep.subr.mxu0 0.0
      %191 = vmatpush1.msra.mxu0 %v167
      %192 = vmatprep.subr.mxu0 0.0
      %193 = vmatpush1.msra.mxu0 %v168
      %194 = vmatprep.subr.mxu0 0.0
      %195 = vmatpush1.msra.mxu0 %v169
      %196 = vmatprep.subr.mxu0 0.0
      %197 = vmatpush1.msra.mxu0 %v170
      %198 = vmatprep.subr.mxu0 0.0
      %199 = vmatpush1.msra.mxu0 %v171
      %200 = vmatprep.subr.mxu0 0.0
      %201 = vmatpush1.msra.mxu0 %v172
      %202 = vmatprep.subr.mxu0 0.0
      %203 = vmatpush1.msra.mxu0 %v173
      %204 = vmatprep.subr.mxu0 0.0
      %205 = vmatpush1.msra.mxu0 %v174
      %206 = vmatprep.subr.mxu0 0.0
      %207 = vmatpush1.msra.mxu0 %v175
      %208 = vmatprep.subr.mxu0 0.0
      %209 = vmatpush1.msra.mxu0 %v176
      %210 = vmatprep.subr.mxu0 0.0
      %211 = vmatpush1.msra.mxu0 %v177
      %212 = vmatprep.subr.mxu0 0.0
      %213 = vmatpush1.msra.mxu0 %v178
      %214 = vmatprep.subr.mxu0 0.0
      %215 = vmatpush1.msra.mxu0 %v179
      %216 = vmatprep.subr.mxu0 0.0
      %217 = vmatpush1.msra.mxu0 %v180
      %218 = vmatprep.subr.mxu0 0.0
      %219 = vmatpush1.msra.mxu0 %v181
      %220 = vmatprep.subr.mxu0 0.0
      %221 = vmatpush1.msra.mxu0 %v182
      %222 = vmatprep.subr.mxu0 0.0
      %223 = vmatpush1.msra.mxu0 0.0
      %224 = vmatprep.subr.mxu0 0.0
      %225 = vmatpush1.msra.mxu0 0.0
      %226 = vmatprep.subr.mxu0 0.0
      %227 = vmatpush1.msra.mxu0 0.0
      %228 = vmatprep.subr.mxu0 0.0
      %229 = vmatpush1.msra.mxu0 0.0
      %230 = vmatprep.subr.mxu0 0.0
      %231 = vmatpush1.msra.mxu0 0.0
      %232 = vmatprep.subr.mxu0 0.0
      %233 = vmatpush1.msra.mxu0 0.0
      %234 = vmatprep.subr.mxu0 0.0
      %235 = vmatpush1.msra.mxu0 0.0
      %236 = vmatprep.subr.mxu0 0.0
      %237 = vmatpush1.msra.mxu0 0.0
      %238 = vmatprep.subr.mxu0 0.0
      %239 = vmatpush1.msra.mxu0 0.0
      %240 = vmatprep.subr.mxu0 0.0
      %241 = vmatpush1.msra.mxu0 0.0
      %242 = vmatprep.subr.mxu0 0.0
      %243 = vmatpush1.msra.mxu0 0.0
      %244 = vmatprep.subr.mxu0 0.0
      %245 = vmatpush1.msra.mxu0 0.0
      %246 = vmatprep.subr.mxu0 0.0
      %247 = vmatpush1.msra.mxu0 0.0
      %248 = vmatprep.subr.mxu0 0.0
      %249 = vmatpush1.msra.mxu0 0.0
      %250 = vmatprep.subr.mxu0 0.0
      %251 = vmatpush1.msra.mxu0 0.0
      %252 = vmatprep.subr.mxu0 0.0
      %253 = vmatpush1.msra.mxu0 0.0
      %254 = vmatprep.mubr.f32.mxu0 0.0
      %255 = vmatmul.mubr.f32.gmra.mrb[0].mxu0 %v166
      %v256 = vpop.f32.mrb[0].mxu0
      %v257 = vadd.f32 %v188, %v256
      %v258 = vpop.f32.mrb[0].mxu0
      %259 = vdwg.mxu0
      %v260 = vadd.f32 %v257, %v166
      %261 = vst [vmem:[%s165] sm:$0xff] %v260
      %p262 = scmp.lt.s32.totalorder %s14, 1
      %s263 = scalar_select %p262, %s14, 1
      %s264 = smul.addr %s263, 8
      %s265 = scalar_lea.vmem %s3, %s264
      // Predicated region
      $region33: #{residual_linear.1} parent=31 // pred_check
        %p266 = pneg %p100
      $region34: #{residual_linear.1} parent=31 // pred_check_branch
        %268 = sbr.rel (%p266) target = $region36
      $region35: #{residual_linear.1} parent=31 // pred_region
        _
      $region36: #{residual_linear.1} parent=31 // pred_fallthru
        _
    $region32: #{residual_linear.1} parent=5 // pred_fallthru
      _
    %p269 = scmp.le.s32.totalorder 2, %s9
    // Predicated region
    $region37: #{residual_linear.1} parent=5 // pred_check
      %p270 = pneg %p269
    $region38: #{residual_linear.1} parent=5 // pred_check_branch
      %272 = sbr.rel (%p270) target = $region40
    $region39: #{residual_linear.1} parent=5 // pred_region
      %s273 = ssub.s32 %s9, 2
      // Predicated region
      $region41: #{residual_linear.1} parent=39 // pred_check
        %p274 = pneg %p106
      $region42: #{residual_linear.1} parent=39 // pred_check_branch
        %276 = sbr.rel (%p274) target = $region44
      $region43: #{residual_linear.1} parent=39 // pred_region
        %p277 = scmp.lt.s32.totalorder %s15, 1
        %s278 = scalar_select %p277, %s15, 1
        %s279 = smul.addr %s278, 8
        %s280 = scalar_lea.vmem %s3, %s279
      $region44: #{residual_linear.1} parent=39 // pred_fallthru
        _
    $region40: #{residual_linear.1} parent=5 // pred_fallthru
      _
  $region6: #{residual_linear.1} parent=0 // loop_footer
    %s13 = sadd.s32 1, %s9
  $region7: #{residual_linear.1} parent=0 // loop_footer_branch
    %8 = sbr.rel target = $region3
  $region8: #{residual_linear.1} parent=0 // loop_exit
    _

</llo_original>
